<compile_context>
chip_gen: v5e
topology: v5e:2x2
jax: 0.10.0
libtpu: 0.0.40
codegen_flags: <defaults>
</compile_context>

<pallas_src>
import jax
import jax.numpy as jnp
from jax import lax
from jax.experimental import pallas as pl
from jax.experimental.pallas import tpu as pltpu


def _cnn_kernel(x_ref, w1_ref, b1_ref, w2_ref, b2_ref,
                wf1_ref, bf1_ref, wf2_ref, bf2_ref, wf3_ref, bf3_ref,
                logits_ref):
    """Whole network on one (B, 20*L) batch block: five MXU matmuls (bf16 in, f32 acc)."""
    f32, bf16 = jnp.float32, jnp.bfloat16
    x = x_ref[...]                                         # (B, 20*L) bf16

    # conv1 (kernel (20,4)) as one banded matmul + bias + relu
    h1 = jnp.dot(x, w1_ref[...], preferred_element_type=f32) + b1_ref[...]
    h1 = jnp.maximum(h1, 0.0)                              # (B, (L-3)*8)
    # maxpool (1,2) stride (1,1): adjacent positions are 8 channels apart
    n1 = h1.shape[1] - 8
    p1 = jnp.maximum(h1[:, :n1], h1[:, 8:])                # (B, (L-4)*8)

    # conv2 (kernel (1,4)) as one banded matmul + bias + relu
    h2 = jnp.dot(p1.astype(bf16), w2_ref[...], preferred_element_type=f32) + b2_ref[...]
    h2 = jnp.maximum(h2, 0.0)                              # (B, (L-7)*16)
    n2 = h2.shape[1] - 16
    p2 = jnp.maximum(h2[:, :n2], h2[:, 16:])               # (B, (L-8)*16)

    # fc1 (+relu); bn1 is folded into the fc2 weights/bias (eval mode)
    y1 = jnp.dot(p2.astype(bf16), wf1_ref[...], preferred_element_type=f32) + bf1_ref[...]
    y1 = jnp.maximum(y1, 0.0)

    # fc2 (+relu) with bn1 folded in; bn2 folded into fc3
    y2 = jnp.dot(y1.astype(bf16), wf2_ref[...], preferred_element_type=f32) + bf2_ref[...]
    y2 = jnp.maximum(y2, 0.0)

    # fc3 (+relu) -> logits
    y3 = jnp.dot(y2.astype(bf16), wf3_ref[...], preferred_element_type=f32) + bf3_ref[...]
    logits_ref[...] = jnp.maximum(y3, 0.0)                 # (B, 2)


def _round16(v):
    return ((v + 15) // 16) * 16


def prepare_params(params, seq_len):
    """One-time weight preprocessing: banded conv matrices, fc1 permutation,
    BN folding, bf16 casts.  Call once, reuse for every forward call."""
    (c1w, c1b, c2w, c2b, f1w, f1b, g1, be1, rm1, rv1,
     f2w, f2b, g2, be2, rm2, rv2, f3w, f3b) = params
    L = seq_len
    H = 20
    W1 = L - 3                                   # conv1 output width
    P1 = L - 4                                   # pool1 output width
    W2 = L - 7                                   # conv2 output width
    Wp = L - 8                                   # pool2 output width
    eps = 1e-5
    f32, bf16 = jnp.float32, jnp.bfloat16

    # ---- conv1 as banded matmul weight: [h*L + l, w*8 + co] ----
    w1k = jnp.transpose(c1w[:, 0, :, :].astype(f32), (1, 2, 0))       # (20,4,8) = [h,kw,co]
    W1big = jnp.zeros((H, L, W1, 8), f32)
    for w in range(W1):
        W1big = W1big.at[:, w:w + 4, w, :].set(w1k)
    W1big = W1big.reshape(H * L, W1 * 8)
    b1big = jnp.tile(c1b.astype(f32), (W1,)).reshape(1, W1 * 8)

    # ---- conv2 as banded matmul weight: [wi*8 + ci, wo*16 + co] ----
    w2k = jnp.transpose(c2w[:, :, 0, :].astype(f32), (2, 1, 0))       # (4,8,16) = [kw,ci,co]
    W2big = jnp.zeros((P1, 8, W2, 16), f32)
    for w in range(W2):
        W2big = W2big.at[w:w + 4, :, w, :].set(w2k)
    W2big = W2big.reshape(P1 * 8, W2 * 16)
    b2big = jnp.tile(c2b.astype(f32), (W2,)).reshape(1, W2 * 16)

    # ---- fc1: kernel's position-major flatten [w*16 + c] vs torch [c*Wp + w] ----
    wf1 = jnp.transpose(f1w.astype(f32).reshape(50, 16, Wp), (2, 1, 0)).reshape(Wp * 16, 50)
    bf1 = f1b.astype(f32).reshape(1, 50)

    # ---- fold bn1 (eval-mode affine) into fc2, bn2 into fc3 ----
    inv1 = g1 / jnp.sqrt(rv1 + eps)
    t1 = be1 - rm1 * inv1
    wf2 = inv1[:, None] * f2w.T.astype(f32)                            # (50, 10)
    bf2 = (t1 @ f2w.T.astype(f32) + f2b).reshape(1, 10)
    inv2 = g2 / jnp.sqrt(rv2 + eps)
    t2 = be2 - rm2 * inv2
    wf3 = inv2[:, None] * f3w.T.astype(f32)                            # (10, 2)
    bf3 = (t2 @ f3w.T.astype(f32) + f3b).reshape(1, 2)

    weights = (W1big.astype(bf16), b1big, W2big.astype(bf16), b2big,
               wf1.astype(bf16), bf1, wf2.astype(bf16), bf2,
               wf3.astype(bf16), bf3)
    return jax.tree_util.tree_map(jax.block_until_ready, weights)


def var_merged_v5_forward(x_nchw, prepared, *, block_batch=None):
    """x_nchw: (N, 1, 20, seq_len) float.  Returns (logits, predictions, probabilities)."""
    N, _, H, L = x_nchw.shape                    # H == 20
    K = H * L
    weights = prepared

    # x is the dominant HBM stream -> stream it as bf16 (no-op if already bf16).
    # Free contiguous reshape, no transpose.
    x_flat = x_nchw.reshape(N, K).astype(jnp.bfloat16)

    def run(x2d, B, steps):
        in_specs = [pl.BlockSpec((B, K), lambda n: (n, 0))]
        in_specs += [pl.BlockSpec(wt.shape, lambda n: (0, 0)) for wt in weights]
        return pl.pallas_call(
            _cnn_kernel,
            out_shape=jax.ShapeDtypeStruct((steps * B, 2), jnp.float32),
            grid=(steps,),
            in_specs=in_specs,
            out_specs=pl.BlockSpec((B, 2), lambda n: (n, 0)),
            # B=2048 bf16 fits comfortably in the default 32 MiB scoped VMEM on
            # all generations; raise vmem_limit_bytes only if sweeping B>2048.
            compiler_params=pltpu.CompilerParams(dimension_semantics=("parallel",)),
        )(x2d, *weights)

    # ---- batch blocking: multiple of 16 (bf16 sublane pack), large blocks to
    # amortize the ~0.35us/step overhead, even step count for v7x's two TCs ----
    if block_batch is None:
        cap = 2048
        steps = max(2, pl.cdiv(N, cap))
        if steps % 2:
            steps += 1
        B = max(16, (N // steps) // 16 * 16)
    else:
        B = max(16, _round16(block_batch))
    num_full = N // B
    rem = N - num_full * B

    parts = []
    if num_full > 0:
        # Full blocks read straight out of x_flat -- no jnp.pad / extra HBM pass.
        parts.append(run(x_flat, B, num_full))
    if rem > 0:
        # Ragged tail: only the (< B) tail rows are copied and padded.
        Bt = max(16, _round16(rem))
        x_tail = jnp.pad(x_flat[num_full * B:], ((0, Bt - rem), (0, 0)))
        parts.append(run(x_tail, Bt, 1)[:rem])
    logits = parts[0] if len(parts) == 1 else jnp.concatenate(parts, axis=0)

    pred = jnp.argmax(logits, axis=1).astype(jnp.int32)
    prob = jax.nn.softmax(logits, axis=1)
    return logits, pred, prob


def reference_forward(x, params):
    """Pure-JAX f32 reference (eval mode) for correctness checking."""
    (c1w, c1b, c2w, c2b, f1w, f1b, g1, be1, rm1, rv1,
     f2w, f2b, g2, be2, rm2, rv2, f3w, f3b) = params
    eps = 1e-5
    dn = ('NCHW', 'OIHW', 'NCHW')
    y = lax.conv_general_dilated(x, c1w, (1, 1), 'VALID', dimension_numbers=dn)
    y = jax.nn.relu(y + c1b[None, :, None, None])
    y = lax.reduce_window(y, -jnp.inf, lax.max, (1, 1, 1, 2), (1, 1, 1, 1), 'VALID')
    y = lax.conv_general_dilated(y, c2w, (1, 1), 'VALID', dimension_numbers=dn)
    y = jax.nn.relu(y + c2b[None, :, None, None])
    y = lax.reduce_window(y, -jnp.inf, lax.max, (1, 1, 1, 2), (1, 1, 1, 1), 'VALID')
    y = y.reshape(y.shape[0], -1)
    y = jax.nn.relu(y @ f1w.T + f1b)
    y = (y - rm1) / jnp.sqrt(rv1 + eps) * g1 + be1
    y = jax.nn.relu(y @ f2w.T + f2b)
    y = (y - rm2) / jnp.sqrt(rv2 + eps) * g2 + be2
    y = jax.nn.relu(y @ f3w.T + f3b)
    return y, jnp.argmax(y, axis=1).astype(jnp.int32), jax.nn.softmax(y, axis=1)


if __name__ == "__main__":
    seq_len = 16
    f32 = jnp.float32
    ks = jax.random.split(jax.random.PRNGKey(0), 19)

    params = (
        0.1 * jax.random.normal(ks[0], (8, 1, 20, 4), f32),             # conv1.weight
        0.1 * jax.random.normal(ks[1], (8,), f32),                      # conv1.bias
        0.1 * jax.random.normal(ks[2], (16, 8, 1, 4), f32),             # conv2.weight
        0.1 * jax.random.normal(ks[3], (16,), f32),                     # conv2.bias
        0.1 * jax.random.normal(ks[4], (50, 16 * (seq_len - 8)), f32),  # fc1.weight
        0.1 * jax.random.normal(ks[5], (50,), f32),                     # fc1.bias
        1.0 + 0.1 * jax.random.normal(ks[6], (50,), f32),               # bn1.weight
        0.1 * jax.random.normal(ks[7], (50,), f32),                     # bn1.bias
        0.05 * jax.random.normal(ks[8], (50,), f32),                    # bn1.running_mean
        1.0 + 0.1 * jnp.abs(jax.random.normal(ks[9], (50,), f32)),      # bn1.running_var
        0.1 * jax.random.normal(ks[10], (10, 50), f32),                 # fc2.weight
        0.1 * jax.random.normal(ks[11], (10,), f32),                    # fc2.bias
        1.0 + 0.1 * jax.random.normal(ks[12], (10,), f32),              # bn2.weight
        0.1 * jax.random.normal(ks[13], (10,), f32),                    # bn2.bias
        0.05 * jax.random.normal(ks[14], (10,), f32),                   # bn2.running_mean
        1.0 + 0.1 * jnp.abs(jax.random.normal(ks[15], (10,), f32)),     # bn2.running_var
        0.1 * jax.random.normal(ks[16], (2, 10), f32),                  # fc3.weight
        0.1 * jax.random.normal(ks[17], (2,), f32),                     # fc3.bias
    )

    prepared = prepare_params(params, seq_len)

    def check(x, block_batch=None, tol=5e-2):
        logits, pred, prob = var_merged_v5_forward(x, prepared, block_batch=block_batch)
        jax.block_until_ready((logits, pred, prob))
        rl, rp, rprob = reference_forward(x, params)
        n = x.shape[0]
        assert logits.shape == (n, 2) and pred.shape == (n,) and prob.shape == (n, 2)
        # bf16 operands (f32 accumulation) vs f32 reference -> loosened tolerance
        assert jnp.allclose(logits, rl, atol=tol, rtol=tol)
        assert jnp.allclose(prob, rprob, atol=tol, rtol=tol)
        # predictions must match wherever the reference logit gap is not a numerical tie
        gap = jnp.abs(rl[:, 0] - rl[:, 1])
        assert jnp.all((pred == rp) | (gap <= tol))

    # two full blocks of 16 (multi-step grid, no tail)
    x_small = jax.random.normal(ks[18], (32, 1, 20, seq_len), f32)
    check(x_small)

    # larger batch with ragged tail: N=200 -> B=96, 2 full blocks + 8-row tail call
    x_big = jax.random.normal(jax.random.fold_in(ks[18], 1), (200, 1, 20, seq_len), f32)
    check(x_big)

    # tiny batch: tail-only path (single padded 16-row block)
    x_tiny = jax.random.normal(jax.random.fold_in(ks[18], 2), (5, 1, 20, seq_len), f32)
    check(x_tiny)

    print("KERNEL_OK")
</pallas_src>

<mosaic_0001>
module attributes {stable_mosaic.version = 11 : i64} {
  func.func @_cnn_kernel(%arg0: i32, %arg1: memref<16x320xbf16, #tpu.memory_space<vmem>>, %arg2: memref<320x104xbf16, #tpu.memory_space<vmem>>, %arg3: memref<1x104xf32, #tpu.memory_space<vmem>>, %arg4: memref<96x144xbf16, #tpu.memory_space<vmem>>, %arg5: memref<1x144xf32, #tpu.memory_space<vmem>>, %arg6: memref<128x50xbf16, #tpu.memory_space<vmem>>, %arg7: memref<1x50xf32, #tpu.memory_space<vmem>>, %arg8: memref<50x10xbf16, #tpu.memory_space<vmem>>, %arg9: memref<1x10xf32, #tpu.memory_space<vmem>>, %arg10: memref<10x2xbf16, #tpu.memory_space<vmem>>, %arg11: memref<1x2xf32, #tpu.memory_space<vmem>>, %arg12: memref<16x2xf32, #tpu.memory_space<vmem>>) attributes {dimension_semantics = [#tpu.dimension_semantics<parallel>], iteration_bounds = array<i64: 2>, scalar_prefetch = 0 : i64, scratch_operands = 0 : i64, tpu.core_type = #tpu.core_type<tc>, window_params = [{transform_indices = @transform_0, window_bounds = array<i64: 16, 320>}, {pipeline_mode = #tpu.pipeline_mode<synchronous>, transform_indices = @transform_1, window_bounds = array<i64: 320, 104>}, {pipeline_mode = #tpu.pipeline_mode<synchronous>, transform_indices = @transform_2, window_bounds = array<i64: 1, 104>}, {pipeline_mode = #tpu.pipeline_mode<synchronous>, transform_indices = @transform_3, window_bounds = array<i64: 96, 144>}, {pipeline_mode = #tpu.pipeline_mode<synchronous>, transform_indices = @transform_4, window_bounds = array<i64: 1, 144>}, {pipeline_mode = #tpu.pipeline_mode<synchronous>, transform_indices = @transform_5, window_bounds = array<i64: 128, 50>}, {pipeline_mode = #tpu.pipeline_mode<synchronous>, transform_indices = @transform_6, window_bounds = array<i64: 1, 50>}, {pipeline_mode = #tpu.pipeline_mode<synchronous>, transform_indices = @transform_7, window_bounds = array<i64: 50, 10>}, {pipeline_mode = #tpu.pipeline_mode<synchronous>, transform_indices = @transform_8, window_bounds = array<i64: 1, 10>}, {pipeline_mode = #tpu.pipeline_mode<synchronous>, transform_indices = @transform_9, window_bounds = array<i64: 10, 2>}, {pipeline_mode = #tpu.pipeline_mode<synchronous>, transform_indices = @transform_10, window_bounds = array<i64: 1, 2>}, {transform_indices = @transform_11, window_bounds = array<i64: 16, 2>}]} {
    %c0 = arith.constant 0 : index
    %c0_0 = arith.constant 0 : index
    %0 = vector.load %arg1[%c0, %c0_0] : memref<16x320xbf16, #tpu.memory_space<vmem>>, vector<16x320xbf16>
    %c0_1 = arith.constant 0 : index
    %c0_2 = arith.constant 0 : index
    %1 = vector.load %arg2[%c0_1, %c0_2] : memref<320x104xbf16, #tpu.memory_space<vmem>>, vector<320x104xbf16>
    %cst = arith.constant dense<0.000000e+00> : vector<16x104xf32>
    %2 = tpu.matmul %0, %1, %cst {dimension_numbers = #tpu.dot_dimension_numbers<[1], [0], [0], [1], [0, 0, 1, 1], [], []>} : vector<16x320xbf16>, vector<320x104xbf16>, vector<16x104xf32> -> vector<16x104xf32>
    %c0_3 = arith.constant 0 : index
    %c0_4 = arith.constant 0 : index
    %3 = vector.load %arg3[%c0_3, %c0_4] : memref<1x104xf32, #tpu.memory_space<vmem>>, vector<1x104xf32>
    %4 = vector.broadcast %3 : vector<1x104xf32> to vector<16x104xf32>
    %5 = arith.addf %2, %4 : vector<16x104xf32>
    %cst_5 = arith.constant 0.000000e+00 : f32
    %6 = vector.broadcast %cst_5 : f32 to vector<16x104xf32>
    %7 = arith.maximumf %5, %6 : vector<16x104xf32>
    %8 = vector.extract_strided_slice %7 {offsets = [0, 0], sizes = [16, 96], strides = [1, 1]} : vector<16x104xf32> to vector<16x96xf32>
    %9 = vector.extract_strided_slice %7 {offsets = [0, 8], sizes = [16, 96], strides = [1, 1]} : vector<16x104xf32> to vector<16x96xf32>
    %10 = arith.maximumf %8, %9 : vector<16x96xf32>
    %11 = arith.truncf %10 : vector<16x96xf32> to vector<16x96xbf16>
    %c0_6 = arith.constant 0 : index
    %c0_7 = arith.constant 0 : index
    %12 = vector.load %arg4[%c0_6, %c0_7] : memref<96x144xbf16, #tpu.memory_space<vmem>>, vector<96x144xbf16>
    %cst_8 = arith.constant dense<0.000000e+00> : vector<16x144xf32>
    %13 = tpu.matmul %11, %12, %cst_8 {dimension_numbers = #tpu.dot_dimension_numbers<[1], [0], [0], [1], [0, 0, 1, 1], [], []>} : vector<16x96xbf16>, vector<96x144xbf16>, vector<16x144xf32> -> vector<16x144xf32>
    %c0_9 = arith.constant 0 : index
    %c0_10 = arith.constant 0 : index
    %14 = vector.load %arg5[%c0_9, %c0_10] : memref<1x144xf32, #tpu.memory_space<vmem>>, vector<1x144xf32>
    %15 = vector.broadcast %14 : vector<1x144xf32> to vector<16x144xf32>
    %16 = arith.addf %13, %15 : vector<16x144xf32>
    %cst_11 = arith.constant 0.000000e+00 : f32
    %17 = vector.broadcast %cst_11 : f32 to vector<16x144xf32>
    %18 = arith.maximumf %16, %17 : vector<16x144xf32>
    %19 = vector.extract_strided_slice %18 {offsets = [0, 0], sizes = [16, 128], strides = [1, 1]} : vector<16x144xf32> to vector<16x128xf32>
    %20 = vector.extract_strided_slice %18 {offsets = [0, 16], sizes = [16, 128], strides = [1, 1]} : vector<16x144xf32> to vector<16x128xf32>
    %21 = arith.maximumf %19, %20 : vector<16x128xf32>
    %22 = arith.truncf %21 : vector<16x128xf32> to vector<16x128xbf16>
    %c0_12 = arith.constant 0 : index
    %c0_13 = arith.constant 0 : index
    %23 = vector.load %arg6[%c0_12, %c0_13] : memref<128x50xbf16, #tpu.memory_space<vmem>>, vector<128x50xbf16>
    %cst_14 = arith.constant dense<0.000000e+00> : vector<16x50xf32>
    %24 = tpu.matmul %22, %23, %cst_14 {dimension_numbers = #tpu.dot_dimension_numbers<[1], [0], [0], [1], [0, 0, 1, 1], [], []>} : vector<16x128xbf16>, vector<128x50xbf16>, vector<16x50xf32> -> vector<16x50xf32>
    %c0_15 = arith.constant 0 : index
    %c0_16 = arith.constant 0 : index
    %25 = vector.load %arg7[%c0_15, %c0_16] : memref<1x50xf32, #tpu.memory_space<vmem>>, vector<1x50xf32>
    %26 = vector.broadcast %25 : vector<1x50xf32> to vector<16x50xf32>
    %27 = arith.addf %24, %26 : vector<16x50xf32>
    %cst_17 = arith.constant 0.000000e+00 : f32
    %28 = vector.broadcast %cst_17 : f32 to vector<16x50xf32>
    %29 = arith.maximumf %27, %28 : vector<16x50xf32>
    %30 = arith.truncf %29 : vector<16x50xf32> to vector<16x50xbf16>
    %c0_18 = arith.constant 0 : index
    %c0_19 = arith.constant 0 : index
    %31 = vector.load %arg8[%c0_18, %c0_19] : memref<50x10xbf16, #tpu.memory_space<vmem>>, vector<50x10xbf16>
    %cst_20 = arith.constant dense<0.000000e+00> : vector<16x10xf32>
    %32 = tpu.matmul %30, %31, %cst_20 {dimension_numbers = #tpu.dot_dimension_numbers<[1], [0], [0], [1], [0, 0, 1, 1], [], []>} : vector<16x50xbf16>, vector<50x10xbf16>, vector<16x10xf32> -> vector<16x10xf32>
    %c0_21 = arith.constant 0 : index
    %c0_22 = arith.constant 0 : index
    %33 = vector.load %arg9[%c0_21, %c0_22] : memref<1x10xf32, #tpu.memory_space<vmem>>, vector<1x10xf32>
    %34 = vector.broadcast %33 : vector<1x10xf32> to vector<16x10xf32>
    %35 = arith.addf %32, %34 : vector<16x10xf32>
    %cst_23 = arith.constant 0.000000e+00 : f32
    %36 = vector.broadcast %cst_23 : f32 to vector<16x10xf32>
    %37 = arith.maximumf %35, %36 : vector<16x10xf32>
    %38 = arith.truncf %37 : vector<16x10xf32> to vector<16x10xbf16>
    %c0_24 = arith.constant 0 : index
    %c0_25 = arith.constant 0 : index
    %39 = vector.load %arg10[%c0_24, %c0_25] : memref<10x2xbf16, #tpu.memory_space<vmem>>, vector<10x2xbf16>
    %cst_26 = arith.constant dense<0.000000e+00> : vector<16x2xf32>
    %40 = tpu.matmul %38, %39, %cst_26 {dimension_numbers = #tpu.dot_dimension_numbers<[1], [0], [0], [1], [0, 0, 1, 1], [], []>} : vector<16x10xbf16>, vector<10x2xbf16>, vector<16x2xf32> -> vector<16x2xf32>
    %c0_27 = arith.constant 0 : index
    %c0_28 = arith.constant 0 : index
    %41 = vector.load %arg11[%c0_27, %c0_28] : memref<1x2xf32, #tpu.memory_space<vmem>>, vector<1x2xf32>
    %42 = vector.broadcast %41 : vector<1x2xf32> to vector<16x2xf32>
    %43 = arith.addf %40, %42 : vector<16x2xf32>
    %cst_29 = arith.constant 0.000000e+00 : f32
    %44 = vector.broadcast %cst_29 : f32 to vector<16x2xf32>
    %45 = arith.maximumf %43, %44 : vector<16x2xf32>
    %c0_30 = arith.constant 0 : index
    %c0_31 = arith.constant 0 : index
    %46 = vector.load %arg12[%c0_30, %c0_31] : memref<16x2xf32, #tpu.memory_space<vmem>>, vector<16x2xf32>
    tpu.vector_store %arg12[%c0_30, %c0_31], %45 {strides = array<i32>} : memref<16x2xf32, #tpu.memory_space<vmem>>, vector<16x2xf32>,
    return
  }
  func.func @transform_0(%arg0: i32) -> (i32, i32) {
    %c0_i32 = arith.constant 0 : i32
    %c0_i32_0 = arith.constant 0 : i32
    return %arg0, %c0_i32 : i32, i32
  }
  func.func @transform_1(%arg0: i32) -> (i32, i32) {
    %c0_i32 = arith.constant 0 : i32
    %c0_i32_0 = arith.constant 0 : i32
    %c0_i32_1 = arith.constant 0 : i32
    return %c0_i32, %c0_i32_0 : i32, i32
  }
  func.func @transform_2(%arg0: i32) -> (i32, i32) {
    %c0_i32 = arith.constant 0 : i32
    %c0_i32_0 = arith.constant 0 : i32
    %c0_i32_1 = arith.constant 0 : i32
    return %c0_i32, %c0_i32_0 : i32, i32
  }
  func.func @transform_3(%arg0: i32) -> (i32, i32) {
    %c0_i32 = arith.constant 0 : i32
    %c0_i32_0 = arith.constant 0 : i32
    %c0_i32_1 = arith.constant 0 : i32
    return %c0_i32, %c0_i32_0 : i32, i32
  }
  func.func @transform_4(%arg0: i32) -> (i32, i32) {
    %c0_i32 = arith.constant 0 : i32
    %c0_i32_0 = arith.constant 0 : i32
    %c0_i32_1 = arith.constant 0 : i32
    return %c0_i32, %c0_i32_0 : i32, i32
  }
  func.func @transform_5(%arg0: i32) -> (i32, i32) {
    %c0_i32 = arith.constant 0 : i32
    %c0_i32_0 = arith.constant 0 : i32
    %c0_i32_1 = arith.constant 0 : i32
    return %c0_i32, %c0_i32_0 : i32, i32
  }
  func.func @transform_6(%arg0: i32) -> (i32, i32) {
    %c0_i32 = arith.constant 0 : i32
    %c0_i32_0 = arith.constant 0 : i32
    %c0_i32_1 = arith.constant 0 : i32
    return %c0_i32, %c0_i32_0 : i32, i32
  }
  func.func @transform_7(%arg0: i32) -> (i32, i32) {
    %c0_i32 = arith.constant 0 : i32
    %c0_i32_0 = arith.constant 0 : i32
    %c0_i32_1 = arith.constant 0 : i32
    return %c0_i32, %c0_i32_0 : i32, i32
  }
  func.func @transform_8(%arg0: i32) -> (i32, i32) {
    %c0_i32 = arith.constant 0 : i32
    %c0_i32_0 = arith.constant 0 : i32
    %c0_i32_1 = arith.constant 0 : i32
    return %c0_i32, %c0_i32_0 : i32, i32
  }
  func.func @transform_9(%arg0: i32) -> (i32, i32) {
    %c0_i32 = arith.constant 0 : i32
    %c0_i32_0 = arith.constant 0 : i32
    %c0_i32_1 = arith.constant 0 : i32
    return %c0_i32, %c0_i32_0 : i32, i32
  }
  func.func @transform_10(%arg0: i32) -> (i32, i32) {
    %c0_i32 = arith.constant 0 : i32
    %c0_i32_0 = arith.constant 0 : i32
    %c0_i32_1 = arith.constant 0 : i32
    return %c0_i32, %c0_i32_0 : i32, i32
  }
  func.func @transform_11(%arg0: i32) -> (i32, i32) {
    %c0_i32 = arith.constant 0 : i32
    %c0_i32_0 = arith.constant 0 : i32
    return %arg0, %c0_i32 : i32, i32
  }
}

</mosaic_0001>

<llo_original>
// kernel: tpu_custom_call.1
$region0: #{tpu_custom_call.1}
  #allocation0 [shape = 'u32[]', space=smem, size = 0x4, offset = 0x4, fixed_abs, tag = 'smem constant byte address 0x4 - core index']
  #allocation1 [shape = 'u32[72,128]{1,0:T(1,128)}', space=vmem, size = 0x9000, scoped, tag = 'internal scratch']
  %s0 = inlined_call_operand.vmem [shape: bf16[32,320], index: 0, kind: input, shape index: {}]
  %s1 = inlined_call_operand.vmem [shape: bf16[320,104], index: 1, kind: input, shape index: {}]
  %s2 = inlined_call_operand.vmem [shape: f32[1,104], index: 2, kind: input, shape index: {}]
  %s3 = inlined_call_operand.vmem [shape: bf16[96,144], index: 3, kind: input, shape index: {}]
  %s4 = inlined_call_operand.vmem [shape: f32[1,144], index: 4, kind: input, shape index: {}]
  %s5 = inlined_call_operand.vmem [shape: bf16[128,50], index: 5, kind: input, shape index: {}]
  %s6 = inlined_call_operand.vmem [shape: f32[1,50], index: 6, kind: input, shape index: {}]
  %s7 = inlined_call_operand.vmem [shape: bf16[50,10], index: 7, kind: input, shape index: {}]
  %s8 = inlined_call_operand.vmem [shape: f32[1,10], index: 8, kind: input, shape index: {}]
  %s9 = inlined_call_operand.vmem [shape: bf16[10,2], index: 9, kind: input, shape index: {}]
  %s10 = inlined_call_operand.vmem [shape: f32[1,2], index: 10, kind: input, shape index: {}]
  %s11 = inlined_call_operand.vmem [shape: f32[32,2], index: 11, kind: output, shape index: {}]
  %s12 = sld [smem:[#allocation0]]
  $region77: #{tpu_custom_call.1} parent=0
    _
  %s14 = ssub.s32 1, %s12
  %s15 = scalar_select 0, %s14, %s12
  loop: start=0, step=1, limit=4
  $region2: #{tpu_custom_call.1} parent=0 // loop_pre_header
    _
  $region3: #{tpu_custom_call.1} parent=0 // loop_header
    %s17 = sphi 0, %s21
    %p18 = scmp.ge.s32.totalorder %s17, 4
    %s27 = sphi 0, %s29
    %s30 = sphi 0, %s27
    %s31 = sphi 0, %s30
    %s47 = sphi 0, %s31
    %s51 = sphi 0, %s51
    %s53 = sphi 0, %s51
    %s54 = sphi 0, %s53
    %s68 = sphi 0, %s54
    %s72 = sphi 0, %s72
    %s74 = sphi 0, %s72
    %s75 = sphi 0, %s74
    %s89 = sphi 0, %s75
    %s93 = sphi 0, %s93
    %s95 = sphi 0, %s93
    %s96 = sphi 0, %s95
    %s110 = sphi 0, %s96
    %s114 = sphi 0, %s114
    %s116 = sphi 0, %s114
    %s117 = sphi 0, %s116
    %s131 = sphi 0, %s117
    %s135 = sphi 0, %s135
    %s137 = sphi 0, %s135
    %s138 = sphi 0, %s137
    %s152 = sphi 0, %s138
    %s156 = sphi 0, %s156
    %s158 = sphi 0, %s156
    %s159 = sphi 0, %s158
    %s173 = sphi 0, %s159
    %s177 = sphi 0, %s177
    %s179 = sphi 0, %s177
    %s180 = sphi 0, %s179
    %s194 = sphi 0, %s180
    %s198 = sphi 0, %s198
    %s200 = sphi 0, %s198
    %s201 = sphi 0, %s200
    %s215 = sphi 0, %s201
    %s219 = sphi 0, %s219
    %s221 = sphi 0, %s219
    %s222 = sphi 0, %s221
    %s236 = sphi 0, %s222
    %s240 = sphi 0, %s240
    %s242 = sphi 0, %s240
    %s243 = sphi 0, %s242
    %s257 = sphi 0, %s243
    %s263 = sphi 0, %s265
    %s266 = sphi 0, %s263
    %s267 = sphi 0, %s266
    %s283 = sphi 0, %s267
  $region4: #{tpu_custom_call.1} parent=0 // loop_header_branch
    %20 = sbr.rel (%p18) target = $region8
  $region5: #{tpu_custom_call.1} parent=0 // loop_body
    %s22 = ssub.s32 %s17, 1
    %s23 = ssub.s32 %s17, 2
    %s24 = sadd.s32 %s17, 1
    %s25 = ssub.s32 %s17, %s24
    %p26 = scmp.eq.s32.totalorder %s25, 0
    %s28 = sadd.s32 %s27, 1
    %s29 = scalar_select %p26, %s27, %s28
    %p32 = pneg %p26
    %p33 = scmp.eq.s32.totalorder %s17, 1
    %p34 = por %p32, %p33
    %p35 = scmp.ne.s32.totalorder %s27, %s30
    %p36 = scmp.eq.s32.totalorder %s17, 0
    %p37 = por %p35, %p36
    %p38 = scmp.ne.s32.totalorder %s27, %s30
    %p39 = scmp.eq.s32.totalorder %s22, 1
    %p40 = por %p38, %p39
    %p41 = scmp.ne.s32.totalorder %s30, %s31
    %p42 = scmp.eq.s32.totalorder %s22, 0
    %p43 = por %p41, %p42
    %p44 = scmp.ne.s32.totalorder %s30, %s31
    %p45 = scmp.eq.s32.totalorder %s23, 1
    %p46 = por %p44, %p45
    %p48 = scmp.ne.s32.totalorder %s31, %s47
    %p49 = scmp.eq.s32.totalorder %s23, 0
    %p50 = por %p48, %p49
    %s52 = sadd.s32 %s51, 1
    %p55 = scmp.eq.s32.totalorder %s17, 1
    %p56 = scmp.ne.s32.totalorder %s51, %s53
    %p57 = scmp.eq.s32.totalorder %s17, 0
    %p58 = por %p56, %p57
    %p59 = scmp.ne.s32.totalorder %s51, %s53
    %p60 = scmp.eq.s32.totalorder %s22, 1
    %p61 = por %p59, %p60
    %p62 = scmp.ne.s32.totalorder %s53, %s54
    %p63 = scmp.eq.s32.totalorder %s22, 0
    %p64 = por %p62, %p63
    %p65 = scmp.ne.s32.totalorder %s53, %s54
    %p66 = scmp.eq.s32.totalorder %s23, 1
    %p67 = por %p65, %p66
    %p69 = scmp.ne.s32.totalorder %s54, %s68
    %p70 = scmp.eq.s32.totalorder %s23, 0
    %p71 = por %p69, %p70
    %s73 = sadd.s32 %s72, 1
    %p76 = scmp.eq.s32.totalorder %s17, 1
    %p77 = scmp.ne.s32.totalorder %s72, %s74
    %p78 = scmp.eq.s32.totalorder %s17, 0
    %p79 = por %p77, %p78
    %p80 = scmp.ne.s32.totalorder %s72, %s74
    %p81 = scmp.eq.s32.totalorder %s22, 1
    %p82 = por %p80, %p81
    %p83 = scmp.ne.s32.totalorder %s74, %s75
    %p84 = scmp.eq.s32.totalorder %s22, 0
    %p85 = por %p83, %p84
    %p86 = scmp.ne.s32.totalorder %s74, %s75
    %p87 = scmp.eq.s32.totalorder %s23, 1
    %p88 = por %p86, %p87
    %p90 = scmp.ne.s32.totalorder %s75, %s89
    %p91 = scmp.eq.s32.totalorder %s23, 0
    %p92 = por %p90, %p91
    %s94 = sadd.s32 %s93, 1
    %p97 = scmp.eq.s32.totalorder %s17, 1
    %p98 = scmp.ne.s32.totalorder %s93, %s95
    %p99 = scmp.eq.s32.totalorder %s17, 0
    %p100 = por %p98, %p99
    %p101 = scmp.ne.s32.totalorder %s93, %s95
    %p102 = scmp.eq.s32.totalorder %s22, 1
    %p103 = por %p101, %p102
    %p104 = scmp.ne.s32.totalorder %s95, %s96
    %p105 = scmp.eq.s32.totalorder %s22, 0
    %p106 = por %p104, %p105
    %p107 = scmp.ne.s32.totalorder %s95, %s96
    %p108 = scmp.eq.s32.totalorder %s23, 1
    %p109 = por %p107, %p108
    %p111 = scmp.ne.s32.totalorder %s96, %s110
    %p112 = scmp.eq.s32.totalorder %s23, 0
    %p113 = por %p111, %p112
    %s115 = sadd.s32 %s114, 1
    %p118 = scmp.eq.s32.totalorder %s17, 1
    %p119 = scmp.ne.s32.totalorder %s114, %s116
    %p120 = scmp.eq.s32.totalorder %s17, 0
    %p121 = por %p119, %p120
    %p122 = scmp.ne.s32.totalorder %s114, %s116
    %p123 = scmp.eq.s32.totalorder %s22, 1
    %p124 = por %p122, %p123
    %p125 = scmp.ne.s32.totalorder %s116, %s117
    %p126 = scmp.eq.s32.totalorder %s22, 0
    %p127 = por %p125, %p126
    %p128 = scmp.ne.s32.totalorder %s116, %s117
    %p129 = scmp.eq.s32.totalorder %s23, 1
    %p130 = por %p128, %p129
    %p132 = scmp.ne.s32.totalorder %s117, %s131
    %p133 = scmp.eq.s32.totalorder %s23, 0
    %p134 = por %p132, %p133
    %s136 = sadd.s32 %s135, 1
    %p139 = scmp.eq.s32.totalorder %s17, 1
    %p140 = scmp.ne.s32.totalorder %s135, %s137
    %p141 = scmp.eq.s32.totalorder %s17, 0
    %p142 = por %p140, %p141
    %p143 = scmp.ne.s32.totalorder %s135, %s137
    %p144 = scmp.eq.s32.totalorder %s22, 1
    %p145 = por %p143, %p144
    %p146 = scmp.ne.s32.totalorder %s137, %s138
    %p147 = scmp.eq.s32.totalorder %s22, 0
    %p148 = por %p146, %p147
    %p149 = scmp.ne.s32.totalorder %s137, %s138
    %p150 = scmp.eq.s32.totalorder %s23, 1
    %p151 = por %p149, %p150
    %p153 = scmp.ne.s32.totalorder %s138, %s152
    %p154 = scmp.eq.s32.totalorder %s23, 0
    %p155 = por %p153, %p154
    %s157 = sadd.s32 %s156, 1
    %p160 = scmp.eq.s32.totalorder %s17, 1
    %p161 = scmp.ne.s32.totalorder %s156, %s158
    %p162 = scmp.eq.s32.totalorder %s17, 0
    %p163 = por %p161, %p162
    %p164 = scmp.ne.s32.totalorder %s156, %s158
    %p165 = scmp.eq.s32.totalorder %s22, 1
    %p166 = por %p164, %p165
    %p167 = scmp.ne.s32.totalorder %s158, %s159
    %p168 = scmp.eq.s32.totalorder %s22, 0
    %p169 = por %p167, %p168
    %p170 = scmp.ne.s32.totalorder %s158, %s159
    %p171 = scmp.eq.s32.totalorder %s23, 1
    %p172 = por %p170, %p171
    %p174 = scmp.ne.s32.totalorder %s159, %s173
    %p175 = scmp.eq.s32.totalorder %s23, 0
    %p176 = por %p174, %p175
    %s178 = sadd.s32 %s177, 1
    %p181 = scmp.eq.s32.totalorder %s17, 1
    %p182 = scmp.ne.s32.totalorder %s177, %s179
    %p183 = scmp.eq.s32.totalorder %s17, 0
    %p184 = por %p182, %p183
    %p185 = scmp.ne.s32.totalorder %s177, %s179
    %p186 = scmp.eq.s32.totalorder %s22, 1
    %p187 = por %p185, %p186
    %p188 = scmp.ne.s32.totalorder %s179, %s180
    %p189 = scmp.eq.s32.totalorder %s22, 0
    %p190 = por %p188, %p189
    %p191 = scmp.ne.s32.totalorder %s179, %s180
    %p192 = scmp.eq.s32.totalorder %s23, 1
    %p193 = por %p191, %p192
    %p195 = scmp.ne.s32.totalorder %s180, %s194
    %p196 = scmp.eq.s32.totalorder %s23, 0
    %p197 = por %p195, %p196
    %s199 = sadd.s32 %s198, 1
    %p202 = scmp.eq.s32.totalorder %s17, 1
    %p203 = scmp.ne.s32.totalorder %s198, %s200
    %p204 = scmp.eq.s32.totalorder %s17, 0
    %p205 = por %p203, %p204
    %p206 = scmp.ne.s32.totalorder %s198, %s200
    %p207 = scmp.eq.s32.totalorder %s22, 1
    %p208 = por %p206, %p207
    %p209 = scmp.ne.s32.totalorder %s200, %s201
    %p210 = scmp.eq.s32.totalorder %s22, 0
    %p211 = por %p209, %p210
    %p212 = scmp.ne.s32.totalorder %s200, %s201
    %p213 = scmp.eq.s32.totalorder %s23, 1
    %p214 = por %p212, %p213
    %p216 = scmp.ne.s32.totalorder %s201, %s215
    %p217 = scmp.eq.s32.totalorder %s23, 0
    %p218 = por %p216, %p217
    %s220 = sadd.s32 %s219, 1
    %p223 = scmp.eq.s32.totalorder %s17, 1
    %p224 = scmp.ne.s32.totalorder %s219, %s221
    %p225 = scmp.eq.s32.totalorder %s17, 0
    %p226 = por %p224, %p225
    %p227 = scmp.ne.s32.totalorder %s219, %s221
    %p228 = scmp.eq.s32.totalorder %s22, 1
    %p229 = por %p227, %p228
    %p230 = scmp.ne.s32.totalorder %s221, %s222
    %p231 = scmp.eq.s32.totalorder %s22, 0
    %p232 = por %p230, %p231
    %p233 = scmp.ne.s32.totalorder %s221, %s222
    %p234 = scmp.eq.s32.totalorder %s23, 1
    %p235 = por %p233, %p234
    %p237 = scmp.ne.s32.totalorder %s222, %s236
    %p238 = scmp.eq.s32.totalorder %s23, 0
    %p239 = por %p237, %p238
    %s241 = sadd.s32 %s240, 1
    %p244 = scmp.eq.s32.totalorder %s17, 1
    %p245 = scmp.ne.s32.totalorder %s240, %s242
    %p246 = scmp.eq.s32.totalorder %s17, 0
    %p247 = por %p245, %p246
    %p248 = scmp.ne.s32.totalorder %s240, %s242
    %p249 = scmp.eq.s32.totalorder %s22, 1
    %p250 = por %p248, %p249
    %p251 = scmp.ne.s32.totalorder %s242, %s243
    %p252 = scmp.eq.s32.totalorder %s22, 0
    %p253 = por %p251, %p252
    %p254 = scmp.ne.s32.totalorder %s242, %s243
    %p255 = scmp.eq.s32.totalorder %s23, 1
    %p256 = por %p254, %p255
    %p258 = scmp.ne.s32.totalorder %s243, %s257
    %p259 = scmp.eq.s32.totalorder %s23, 0
    %p260 = por %p258, %p259
    %s261 = ssub.s32 %s17, %s24
    %p262 = scmp.eq.s32.totalorder %s261, 0
    %s264 = sadd.s32 %s263, 1
    %s265 = scalar_select %p262, %s263, %s264
    %p268 = pneg %p262
    %p269 = scmp.eq.s32.totalorder %s17, 1
    %p270 = por %p268, %p269
    %p271 = scmp.ne.s32.totalorder %s263, %s266
    %p272 = scmp.eq.s32.totalorder %s17, 0
    %p273 = por %p271, %p272
    %p274 = scmp.ne.s32.totalorder %s263, %s266
    %p275 = scmp.eq.s32.totalorder %s22, 1
    %p276 = por %p274, %p275
    %p277 = scmp.ne.s32.totalorder %s266, %s267
    %p278 = scmp.eq.s32.totalorder %s22, 0
    %p279 = por %p277, %p278
    %p280 = scmp.ne.s32.totalorder %s266, %s267
    %p281 = scmp.eq.s32.totalorder %s23, 1
    %p282 = por %p280, %p281
    %p284 = scmp.ne.s32.totalorder %s267, %s283
    %p285 = scmp.eq.s32.totalorder %s23, 0
    %p286 = por %p284, %p285
    %p287 = scmp.le.s32.totalorder 1, %s17
    %p288 = scmp.lt.s32.totalorder %s17, 3
    %p289 = pnand %p287, %p288
    %p290 = pneg %p289
    // Predicated region
    $region9: #{tpu_custom_call.1} parent=5 // pred_check
      _
    $region10: #{tpu_custom_call.1} parent=5 // pred_check_branch
      %292 = sbr.rel (%p289) target = $region12
    $region11: #{tpu_custom_call.1} parent=5 // pred_region
      %s293 = ssub.s32 %s17, 1
      // Predicated region
      $region13: #{tpu_custom_call.1} parent=11 // pred_check
        %p294 = pneg %p64
      $region14: #{tpu_custom_call.1} parent=11 // pred_check_branch
        %296 = sbr.rel (%p294) target = $region16
      $region15: #{tpu_custom_call.1} parent=11 // pred_region
        _
      $region16: #{tpu_custom_call.1} parent=11 // pred_fallthru
        _
      // Predicated region
      $region17: #{tpu_custom_call.1} parent=11 // pred_check
        %p297 = pneg %p85
      $region18: #{tpu_custom_call.1} parent=11 // pred_check_branch
        %299 = sbr.rel (%p297) target = $region20
      $region19: #{tpu_custom_call.1} parent=11 // pred_region
        _
      $region20: #{tpu_custom_call.1} parent=11 // pred_fallthru
        _
      // Predicated region
      $region21: #{tpu_custom_call.1} parent=11 // pred_check
        %p300 = pneg %p106
      $region22: #{tpu_custom_call.1} parent=11 // pred_check_branch
        %302 = sbr.rel (%p300) target = $region24
      $region23: #{tpu_custom_call.1} parent=11 // pred_region
        _
      $region24: #{tpu_custom_call.1} parent=11 // pred_fallthru
        _
      // Predicated region
      $region25: #{tpu_custom_call.1} parent=11 // pred_check
        %p303 = pneg %p127
      $region26: #{tpu_custom_call.1} parent=11 // pred_check_branch
        %305 = sbr.rel (%p303) target = $region28
      $region27: #{tpu_custom_call.1} parent=11 // pred_region
        _
      $region28: #{tpu_custom_call.1} parent=11 // pred_fallthru
        _
      // Predicated region
      $region29: #{tpu_custom_call.1} parent=11 // pred_check
        %p306 = pneg %p148
      $region30: #{tpu_custom_call.1} parent=11 // pred_check_branch
        %308 = sbr.rel (%p306) target = $region32
      $region31: #{tpu_custom_call.1} parent=11 // pred_region
        _
      $region32: #{tpu_custom_call.1} parent=11 // pred_fallthru
        _
      // Predicated region
      $region33: #{tpu_custom_call.1} parent=11 // pred_check
        %p309 = pneg %p169
      $region34: #{tpu_custom_call.1} parent=11 // pred_check_branch
        %311 = sbr.rel (%p309) target = $region36
      $region35: #{tpu_custom_call.1} parent=11 // pred_region
        _
      $region36: #{tpu_custom_call.1} parent=11 // pred_fallthru
        _
      // Predicated region
      $region37: #{tpu_custom_call.1} parent=11 // pred_check
        %p312 = pneg %p190
      $region38: #{tpu_custom_call.1} parent=11 // pred_check_branch
        %314 = sbr.rel (%p312) target = $region40
      $region39: #{tpu_custom_call.1} parent=11 // pred_region
        _
      $region40: #{tpu_custom_call.1} parent=11 // pred_fallthru
        _
      // Predicated region
      $region41: #{tpu_custom_call.1} parent=11 // pred_check
        %p315 = pneg %p211
      $region42: #{tpu_custom_call.1} parent=11 // pred_check_branch
        %317 = sbr.rel (%p315) target = $region44
      $region43: #{tpu_custom_call.1} parent=11 // pred_region
        _
      $region44: #{tpu_custom_call.1} parent=11 // pred_fallthru
        _
      // Predicated region
      $region45: #{tpu_custom_call.1} parent=11 // pred_check
        %p318 = pneg %p232
      $region46: #{tpu_custom_call.1} parent=11 // pred_check_branch
        %320 = sbr.rel (%p318) target = $region48
      $region47: #{tpu_custom_call.1} parent=11 // pred_region
        _
      $region48: #{tpu_custom_call.1} parent=11 // pred_fallthru
        _
      // Predicated region
      $region49: #{tpu_custom_call.1} parent=11 // pred_check
        %p321 = pneg %p253
      $region50: #{tpu_custom_call.1} parent=11 // pred_check_branch
        %323 = sbr.rel (%p321) target = $region52
      $region51: #{tpu_custom_call.1} parent=11 // pred_region
        _
      $region52: #{tpu_custom_call.1} parent=11 // pred_fallthru
        _
    $region12: #{tpu_custom_call.1} parent=5 // pred_fallthru
      _
    %p324 = scmp.lt.s32.totalorder %s17, 2
    // Predicated region
    $region53: #{tpu_custom_call.1} parent=5 // pred_check
      %p325 = pneg %p324
    $region54: #{tpu_custom_call.1} parent=5 // pred_check_branch
      %327 = sbr.rel (%p325) target = $region56
    $region55: #{tpu_custom_call.1} parent=5 // pred_region
      // Predicated region
      $region57: #{tpu_custom_call.1} parent=55 // pred_check
        %p328 = pneg %p37
      $region58: #{tpu_custom_call.1} parent=55 // pred_check_branch
        %330 = sbr.rel (%p328) target = $region60
      $region59: #{tpu_custom_call.1} parent=55 // pred_region
        %s331 = smul.u32 2, %s17
        %p332 = scmp.lt.s32.totalorder %s331, 3
        %s333 = scalar_select %p332, %s331, 3
        %s334 = smul.addr %s333, 3
        %s335 = smul.addr %s334, 4
        %s336 = scalar_lea.vmem %s0, %s335
        %s337 = smul.u32 2, %s17
      $region60: #{tpu_custom_call.1} parent=55 // pred_fallthru
        _
    $region56: #{tpu_custom_call.1} parent=5 // pred_fallthru
      _
    %p338 = scmp.le.s32.totalorder 1, %s17
    %p339 = scmp.lt.s32.totalorder %s17, 3
    %p340 = pnand %p338, %p339
    %p341 = pneg %p340
    // Predicated region
    $region61: #{tpu_custom_call.1} parent=5 // pred_check
      _
    $region62: #{tpu_custom_call.1} parent=5 // pred_check_branch
      %343 = sbr.rel (%p340) target = $region64
    $region63: #{tpu_custom_call.1} parent=5 // pred_region
      %s344 = ssub.s32 %s17, 1
      %s345 = smul.u32 2, %s22
      %p346 = scmp.lt.s32.totalorder %s345, 3
      %s347 = scalar_select %p346, %s345, 3
      %s348 = smul.addr %s347, 3
      %s349 = smul.addr %s348, 4
      %s350 = scalar_lea.vmem %s0, %s349
      %p351 = pneg %p43
      %p352 = pneg %p40
      %p353 = pneg %p64
      %p354 = pneg %p61
      %p355 = pneg %p85
      %p356 = pneg %p82
      %p357 = pneg %p106
      %p358 = pneg %p103
      %p359 = pneg %p127
      %p360 = pneg %p124
      %p361 = pneg %p148
      %p362 = pneg %p145
      %p363 = pneg %p169
      %p364 = pneg %p166
      %p365 = pneg %p190
      %p366 = pneg %p187
      %p367 = pneg %p211
      %p368 = pneg %p208
      %p369 = pneg %p232
      %p370 = pneg %p229
      %p371 = pneg %p253
      %p372 = pneg %p250
      %p373 = pneg %p279
      %p374 = pneg %p276
      %s375 = smul.u32 2, %s22
      %p376 = scmp.lt.s32.totalorder %s375, 3
      %s377 = scalar_select %p376, %s375, 3
      %s378 = smul.addr %s377, 8
      %s379 = scalar_lea.vmem %s11, %s378
      %s380 = smul.u32 2, %s22
      %p381 = scmp.lt.s32.totalorder %s380, 3
      %s382 = scalar_select %p381, %s380, 3
      %s383 = smul.addr %s382, 3
      %s384 = smul.addr %s383, 4
      %s385 = scalar_lea.vmem %s0, %s384
      %s386 = smul.u32 2, %s22
      %s387 = smul.u32 2, %s22
      %p388 = scmp.lt.s32.totalorder %s387, 3
      %s389 = scalar_select %p388, %s387, 3
      %s390 = smul.addr %s389, 8
      %s391 = scalar_lea.vmem %s11, %s390
      %s392 = smul.u32 2, %s22
      %v394 = vld [vmem:[%s385] sm:$0xff]
      %v395 = vld [vmem:[%s385 + $0x8] sm:$0xf]
      %v396 = vld [vmem:[%s385 + $0xc] sm:$0xff]
      %v397 = vld [vmem:[%s385 + $0x14] sm:$0xf]
      %v398 = vld [vmem:[%s1] sm:$0xf]
      %v399 = vld [vmem:[%s1 + $0x4] sm:$0xf]
      %v400 = vld [vmem:[%s1 + $0x8] sm:$0xf]
      %v401 = vld [vmem:[%s1 + $0xc] sm:$0xf]
      %v402 = vld [vmem:[%s1 + $0x10] sm:$0xf]
      %v403 = vld [vmem:[%s1 + $0x14] sm:$0xf]
      %v404 = vld [vmem:[%s1 + $0x18] sm:$0xf]
      %v405 = vld [vmem:[%s1 + $0x1c] sm:$0xf]
      %v406 = vld [vmem:[%s1 + $0x20] sm:$0xf]
      %v407 = vld [vmem:[%s1 + $0x24] sm:$0xf]
      %v408 = vld [vmem:[%s1 + $0x28] sm:$0xf]
      %v409 = vld [vmem:[%s1 + $0x2c] sm:$0xf]
      %v410 = vld [vmem:[%s1 + $0x30] sm:$0xf]
      %v411 = vld [vmem:[%s1 + $0x34] sm:$0xf]
      %v412 = vld [vmem:[%s1 + $0x38] sm:$0xf]
      %v413 = vld [vmem:[%s1 + $0x3c] sm:$0xf]
      %v414 = vld [vmem:[%s1 + $0x40] sm:$0xf]
      %v415 = vld [vmem:[%s1 + $0x44] sm:$0xf]
      %v416 = vld [vmem:[%s1 + $0x48] sm:$0xf]
      %v417 = vld [vmem:[%s1 + $0x4c] sm:$0xf]
      %v418 = vld [vmem:[%s1 + $0x50] sm:$0xf]
      %v419 = vld [vmem:[%s1 + $0x54] sm:$0xf]
      %v420 = vld [vmem:[%s1 + $0x58] sm:$0xf]
      %v421 = vld [vmem:[%s1 + $0x5c] sm:$0xf]
      %v422 = vld [vmem:[%s1 + $0x60] sm:$0xf]
      %v423 = vld [vmem:[%s1 + $0x64] sm:$0xf]
      %v424 = vld [vmem:[%s1 + $0x68] sm:$0xf]
      %v425 = vld [vmem:[%s1 + $0x6c] sm:$0xf]
      %v426 = vld [vmem:[%s1 + $0x70] sm:$0xf]
      %v427 = vld [vmem:[%s1 + $0x74] sm:$0xf]
      %v428 = vld [vmem:[%s1 + $0x78] sm:$0xf]
      %v429 = vld [vmem:[%s1 + $0x7c] sm:$0xf]
      %v430 = vld [vmem:[%s1 + $0x80] sm:$0xf]
      %v431 = vld [vmem:[%s1 + $0x84] sm:$0xf]
      %v432 = vld [vmem:[%s1 + $0x88] sm:$0xf]
      %v433 = vld [vmem:[%s1 + $0x8c] sm:$0xf]
      %v434 = vld [vmem:[%s1 + $0x90] sm:$0xf]
      %v435 = vld [vmem:[%s1 + $0x94] sm:$0xf]
      %v436 = vld [vmem:[%s1 + $0x98] sm:$0xf]
      %v437 = vld [vmem:[%s1 + $0x9c] sm:$0xf]
      %v438 = vld [vmem:[%s2] sm:$0x1]
      %v440 = vperm.slane %v438, 0
      %v446 = vunpack.c.l.b16 %v394
      %v447 = vunpack.c.h.b16 %v394
      %v448 = vunpack.c.l.b16 %v395
      %v449 = vunpack.c.l.b16 %v396
      %v450 = vunpack.c.h.b16 %v396
      %v451 = vunpack.c.l.b16 %v397
      %v452 = vpack.c.b16 %v449, %v446
      %v453 = vpack.c.b16 %v450, %v447
      %v454 = vpack.c.b16 %v451, %v448
      %v497 = vunpack.c.l.b16 %v398
      %v498 = vunpack.c.l.b16 %v399
      %v499 = vunpack.c.l.b16 %v400
      %v500 = vunpack.c.l.b16 %v401
      %v501 = vunpack.c.l.b16 %v402
      %v502 = vunpack.c.l.b16 %v403
      %v503 = vunpack.c.l.b16 %v404
      %v504 = vunpack.c.l.b16 %v405
      %v505 = vunpack.c.l.b16 %v406
      %v506 = vunpack.c.l.b16 %v407
      %v507 = vunpack.c.l.b16 %v408
      %v508 = vunpack.c.l.b16 %v409
      %v509 = vunpack.c.l.b16 %v410
      %v510 = vunpack.c.l.b16 %v411
      %v511 = vunpack.c.l.b16 %v412
      %v512 = vunpack.c.l.b16 %v413
      %v513 = vunpack.c.l.b16 %v414
      %v514 = vunpack.c.l.b16 %v415
      %v515 = vunpack.c.l.b16 %v416
      %v516 = vunpack.c.l.b16 %v417
      %v517 = vunpack.c.l.b16 %v418
      %v518 = vunpack.c.l.b16 %v419
      %v519 = vunpack.c.l.b16 %v420
      %v520 = vunpack.c.l.b16 %v421
      %v521 = vunpack.c.l.b16 %v422
      %v522 = vunpack.c.l.b16 %v423
      %v523 = vunpack.c.l.b16 %v424
      %v524 = vunpack.c.l.b16 %v425
      %v525 = vunpack.c.l.b16 %v426
      %v526 = vunpack.c.l.b16 %v427
      %v527 = vunpack.c.l.b16 %v428
      %v528 = vunpack.c.l.b16 %v429
      %v529 = vunpack.c.l.b16 %v430
      %v530 = vunpack.c.l.b16 %v431
      %v531 = vunpack.c.l.b16 %v432
      %v532 = vunpack.c.l.b16 %v433
      %v533 = vunpack.c.l.b16 %v434
      %v534 = vunpack.c.l.b16 %v435
      %v535 = vunpack.c.l.b16 %v436
      %v536 = vunpack.c.l.b16 %v437
      %v537 = vpack.c.b16 %v498, %v497
      %v538 = vpack.c.b16 %v500, %v499
      %v539 = vpack.c.b16 %v502, %v501
      %v540 = vpack.c.b16 %v504, %v503
      %v541 = vpack.c.b16 %v506, %v505
      %v542 = vpack.c.b16 %v508, %v507
      %v543 = vpack.c.b16 %v510, %v509
      %v544 = vpack.c.b16 %v512, %v511
      %v545 = vpack.c.b16 %v514, %v513
      %v546 = vpack.c.b16 %v516, %v515
      %v547 = vpack.c.b16 %v518, %v517
      %v548 = vpack.c.b16 %v520, %v519
      %v549 = vpack.c.b16 %v522, %v521
      %v550 = vpack.c.b16 %v524, %v523
      %v551 = vpack.c.b16 %v526, %v525
      %v552 = vpack.c.b16 %v528, %v527
      %v553 = vpack.c.b16 %v530, %v529
      %v554 = vpack.c.b16 %v532, %v531
      %v555 = vpack.c.b16 %v534, %v533
      %v556 = vpack.c.b16 %v536, %v535
      %vm577 = vcmask 523264
      %v579 = vsel %vm577, %v454, 0
      %581 = vmatpush.bf16.msra.mxu0 %v544
      %582 = vmatpush.bf16.msra.mxu0 %v543
      %583 = vmatpush.bf16.msra.mxu0 %v542
      %584 = vmatpush.bf16.msra.mxu0 %v541
      %585 = vmatpush.bf16.msra.mxu0 %v540
      %586 = vmatpush.bf16.msra.mxu0 %v539
      %587 = vmatpush.bf16.msra.mxu0 %v538
      %588 = vmatpush.bf16.msra.mxu0 %v537
      %589 = vmatmul.bf16.gmra.mxu0 %v452
      %v590 = vpop.f32.mrf.mxu0
      %v591 = vadd.f32 %v440, %v590
      %v592 = vpop.f32.mrf.mxu0
      %v593 = vadd.f32 %v440, %v592
      %594 = vdwg.mxu0
      %595 = vmatpush.bf16.msra.mxu0 %v552
      %596 = vmatpush.bf16.msra.mxu0 %v551
      %597 = vmatpush.bf16.msra.mxu0 %v550
      %598 = vmatpush.bf16.msra.mxu0 %v549
      %599 = vmatpush.bf16.msra.mxu0 %v548
      %600 = vmatpush.bf16.msra.mxu0 %v547
      %601 = vmatpush.bf16.msra.mxu0 %v546
      %602 = vmatpush.bf16.msra.mxu0 %v545
      %603 = vmatmul.bf16.gmra.mxu0 %v453
      %v604 = vpop.f32.mrf.mxu0
      %v605 = vadd.f32 %v591, %v604
      %v606 = vpop.f32.mrf.mxu0
      %v607 = vadd.f32 %v593, %v606
      %608 = vdwg.mxu0
      %609 = vmatpush.bf16.msra.mxu0 0
      %610 = vmatpush.bf16.msra.mxu0 0
      %611 = vmatpush.bf16.msra.mxu0 0
      %612 = vmatpush.bf16.msra.mxu0 0
      %613 = vmatpush.bf16.msra.mxu0 %v556
      %614 = vmatpush.bf16.msra.mxu0 %v555
      %615 = vmatpush.bf16.msra.mxu0 %v554
      %616 = vmatpush.bf16.msra.mxu0 %v553
      %617 = vmatmul.bf16.gmra.mxu0 %v579
      %v618 = vpop.f32.mrf.mxu0
      %v619 = vadd.f32 %v605, %v618
      %v620 = vpop.f32.mrf.mxu0
      %v621 = vadd.f32 %v607, %v620
      %622 = vdwg.mxu0
      %v623 = vmax.f32 %v619, 0.0
      %v624 = vmax.f32 %v621, 0.0
      %627 = vrot.lane.b32.xlu0 %v623, 120
      %v628 = vpop.permute.xlu0 %627
      %629 = vrot.lane.b32.xlu0 %v624, 120
      %v630 = vpop.permute.xlu0 %629
      %v633 = vmax.f32 %v623, %v628
      %v634 = vmax.f32 %v624, %v630
      %v635 = vpack.c.bf16 %v634, %v633
      %v636 = vld [vmem:[%s3] sm:$0xff]
      %v637 = vld [vmem:[%s3 + $0x8] sm:$0xff]
      %v638 = vld [vmem:[%s3 + $0x10] sm:$0xff]
      %v639 = vld [vmem:[%s3 + $0x18] sm:$0xff]
      %v640 = vld [vmem:[%s3 + $0x20] sm:$0xff]
      %v641 = vld [vmem:[%s3 + $0x28] sm:$0xff]
      %v642 = vld [vmem:[%s3 + $0x30] sm:$0xff]
      %v643 = vld [vmem:[%s3 + $0x38] sm:$0xff]
      %v644 = vld [vmem:[%s3 + $0x40] sm:$0xff]
      %v645 = vld [vmem:[%s3 + $0x48] sm:$0xff]
      %v646 = vld [vmem:[%s3 + $0x50] sm:$0xff]
      %v647 = vld [vmem:[%s3 + $0x58] sm:$0xff]
      %v648 = vld [vmem:[%s4] sm:$0x3]
      %v650 = vperm.slane %v648, 0
      %v651 = vperm.slane %v648, 1
      %v666 = vunpack.c.l.b16 %v636
      %v667 = vunpack.c.h.b16 %v636
      %v668 = vunpack.c.l.b16 %v637
      %v669 = vunpack.c.h.b16 %v637
      %v670 = vunpack.c.l.b16 %v638
      %v671 = vunpack.c.h.b16 %v638
      %v672 = vunpack.c.l.b16 %v639
      %v673 = vunpack.c.h.b16 %v639
      %v674 = vunpack.c.l.b16 %v640
      %v675 = vunpack.c.h.b16 %v640
      %v676 = vunpack.c.l.b16 %v641
      %v677 = vunpack.c.h.b16 %v641
      %v678 = vunpack.c.l.b16 %v642
      %v679 = vunpack.c.h.b16 %v642
      %v680 = vunpack.c.l.b16 %v643
      %v681 = vunpack.c.h.b16 %v643
      %v682 = vunpack.c.l.b16 %v644
      %v683 = vunpack.c.h.b16 %v644
      %v684 = vunpack.c.l.b16 %v645
      %v685 = vunpack.c.h.b16 %v645
      %v686 = vunpack.c.l.b16 %v646
      %v687 = vunpack.c.h.b16 %v646
      %v688 = vunpack.c.l.b16 %v647
      %v689 = vunpack.c.h.b16 %v647
      %v690 = vpack.c.b16 %v668, %v666
      %v691 = vpack.c.b16 %v669, %v667
      %v692 = vpack.c.b16 %v672, %v670
      %v693 = vpack.c.b16 %v673, %v671
      %v694 = vpack.c.b16 %v676, %v674
      %v695 = vpack.c.b16 %v677, %v675
      %v696 = vpack.c.b16 %v680, %v678
      %v697 = vpack.c.b16 %v681, %v679
      %v698 = vpack.c.b16 %v684, %v682
      %v699 = vpack.c.b16 %v685, %v683
      %v700 = vpack.c.b16 %v688, %v686
      %v701 = vpack.c.b16 %v689, %v687
      %vm714 = vcmask 785408
      %v716 = vsel %vm714, %v635, 0
      %718 = vmatpush.bf16.msra.mxu0 0
      %719 = vmatpush.bf16.msra.mxu0 0
      %720 = vmatpush.bf16.msra.mxu0 %v700
      %721 = vmatpush.bf16.msra.mxu0 %v698
      %722 = vmatpush.bf16.msra.mxu0 %v696
      %723 = vmatpush.bf16.msra.mxu0 %v694
      %724 = vmatpush.bf16.msra.mxu0 %v692
      %725 = vmatpush.bf16.msra.mxu0 %v690
      %726 = vmatmul.bf16.gmra.mxu0 %v716
      %v727 = vpop.f32.mrf.mxu0
      %v728 = vadd.f32 %v650, %v727
      %v729 = vpop.f32.mrf.mxu0
      %v730 = vadd.f32 %v650, %v729
      %731 = vdwg.mxu0
      %732 = vmatpush.bf16.msra.mxu0 0
      %733 = vmatpush.bf16.msra.mxu0 0
      %734 = vmatpush.bf16.msra.mxu0 %v701
      %735 = vmatpush.bf16.msra.mxu0 %v699
      %736 = vmatpush.bf16.msra.mxu0 %v697
      %737 = vmatpush.bf16.msra.mxu0 %v695
      %738 = vmatpush.bf16.msra.mxu0 %v693
      %739 = vmatpush.bf16.msra.mxu0 %v691
      %740 = vmatmul.bf16.gmra.mxu0 %v716
      %v741 = vpop.f32.mrf.mxu0
      %v742 = vadd.f32 %v651, %v741
      %v743 = vpop.f32.mrf.mxu0
      %v744 = vadd.f32 %v651, %v743
      %745 = vdwg.mxu0
      %v746 = vmax.f32 %v728, 0.0
      %v747 = vmax.f32 %v742, 0.0
      %v748 = vmax.f32 %v730, 0.0
      %v749 = vmax.f32 %v744, 0.0
      %754 = vrot.lane.b32.xlu0 %v746, 112
      %v755 = vpop.permute.xlu0 %754
      %756 = vrot.lane.b32.xlu0 %v747, 112
      %v757 = vpop.permute.xlu0 %756
      %758 = vrot.lane.b32.xlu0 %v748, 112
      %v759 = vpop.permute.xlu0 %758
      %760 = vrot.lane.b32.xlu0 %v749, 112
      %v761 = vpop.permute.xlu0 %760
      %vm762 = vcmask 916480
      %v763 = vsel %vm762, %v755, %v757
      %v764 = vsel %vm762, %v759, %v761
      %v767 = vmax.f32 %v746, %v763
      %v768 = vmax.f32 %v748, %v764
      %v769 = vpack.c.bf16 %v768, %v767
      %v770 = vld [vmem:[%s5] sm:$0xf]
      %v771 = vld [vmem:[%s5 + $0x4] sm:$0xf]
      %v772 = vld [vmem:[%s5 + $0x8] sm:$0xf]
      %v773 = vld [vmem:[%s5 + $0xc] sm:$0xf]
      %v774 = vld [vmem:[%s5 + $0x10] sm:$0xf]
      %v775 = vld [vmem:[%s5 + $0x14] sm:$0xf]
      %v776 = vld [vmem:[%s5 + $0x18] sm:$0xf]
      %v777 = vld [vmem:[%s5 + $0x1c] sm:$0xf]
      %v778 = vld [vmem:[%s5 + $0x20] sm:$0xf]
      %v779 = vld [vmem:[%s5 + $0x24] sm:$0xf]
      %v780 = vld [vmem:[%s5 + $0x28] sm:$0xf]
      %v781 = vld [vmem:[%s5 + $0x2c] sm:$0xf]
      %v782 = vld [vmem:[%s5 + $0x30] sm:$0xf]
      %v783 = vld [vmem:[%s5 + $0x34] sm:$0xf]
      %v784 = vld [vmem:[%s5 + $0x38] sm:$0xf]
      %v785 = vld [vmem:[%s5 + $0x3c] sm:$0xf]
      %v786 = vld [vmem:[%s6] sm:$0x1]
      %v788 = vperm.slane %v786, 0
      %v806 = vunpack.c.l.b16 %v770
      %v807 = vunpack.c.l.b16 %v771
      %v808 = vunpack.c.l.b16 %v772
      %v809 = vunpack.c.l.b16 %v773
      %v810 = vunpack.c.l.b16 %v774
      %v811 = vunpack.c.l.b16 %v775
      %v812 = vunpack.c.l.b16 %v776
      %v813 = vunpack.c.l.b16 %v777
      %v814 = vunpack.c.l.b16 %v778
      %v815 = vunpack.c.l.b16 %v779
      %v816 = vunpack.c.l.b16 %v780
      %v817 = vunpack.c.l.b16 %v781
      %v818 = vunpack.c.l.b16 %v782
      %v819 = vunpack.c.l.b16 %v783
      %v820 = vunpack.c.l.b16 %v784
      %v821 = vunpack.c.l.b16 %v785
      %v822 = vpack.c.b16 %v807, %v806
      %v823 = vpack.c.b16 %v809, %v808
      %v824 = vpack.c.b16 %v811, %v810
      %v825 = vpack.c.b16 %v813, %v812
      %v826 = vpack.c.b16 %v815, %v814
      %v827 = vpack.c.b16 %v817, %v816
      %v828 = vpack.c.b16 %v819, %v818
      %v829 = vpack.c.b16 %v821, %v820
      %838 = vmatpush.bf16.msra.mxu0 %v829
      %839 = vmatpush.bf16.msra.mxu0 %v828
      %840 = vmatpush.bf16.msra.mxu0 %v827
      %841 = vmatpush.bf16.msra.mxu0 %v826
      %842 = vmatpush.bf16.msra.mxu0 %v825
      %843 = vmatpush.bf16.msra.mxu0 %v824
      %844 = vmatpush.bf16.msra.mxu0 %v823
      %845 = vmatpush.bf16.msra.mxu0 %v822
      %846 = vmatmul.bf16.gmra.mxu0 %v769
      %v847 = vpop.f32.mrf.mxu0
      %v848 = vadd.f32 %v788, %v847
      %v849 = vpop.f32.mrf.mxu0
      %v850 = vadd.f32 %v788, %v849
      %851 = vdwg.mxu0
      %v852 = vmax.f32 %v848, 0.0
      %v853 = vmax.f32 %v850, 0.0
      %v854 = vpack.c.bf16 %v853, %v852
      %v855 = vld [vmem:[%s7] sm:$0xf]
      %v856 = vld [vmem:[%s7 + $0x4] sm:$0xf]
      %v857 = vld [vmem:[%s7 + $0x8] sm:$0xf]
      %v858 = vld [vmem:[%s7 + $0xc] sm:$0xf]
      %v859 = vld [vmem:[%s7 + $0x10] sm:$0xf]
      %v860 = vld [vmem:[%s7 + $0x14] sm:$0xf]
      %v861 = vld [vmem:[%s7 + $0x18] sm:$0x1]
      %v862 = vld [vmem:[%s8] sm:$0x1]
      %v864 = vperm.slane %v862, 0
      %v873 = vunpack.c.l.b16 %v855
      %v874 = vunpack.c.l.b16 %v856
      %v875 = vunpack.c.l.b16 %v857
      %v876 = vunpack.c.l.b16 %v858
      %v877 = vunpack.c.l.b16 %v859
      %v878 = vunpack.c.l.b16 %v860
      %v879 = vunpack.c.l.b16 %v861
      %v880 = vpack.c.b16 %v874, %v873
      %v881 = vpack.c.b16 %v876, %v875
      %v882 = vpack.c.b16 %v878, %v877
      %v883 = vpack.c.b16 %v879, %v879
      %vm887 = vcmask 408576
      %v889 = vsel %vm887, %v854, 0
      %vm891 = vcmask 1040384
      %v893 = vsel %vm891, %v883, 0
      %895 = vmatpush.bf16.msra.mxu0 0
      %896 = vmatpush.bf16.msra.mxu0 0
      %897 = vmatpush.bf16.msra.mxu0 0
      %898 = vmatpush.bf16.msra.mxu0 0
      %899 = vmatpush.bf16.msra.mxu0 %v893
      %900 = vmatpush.bf16.msra.mxu0 %v882
      %901 = vmatpush.bf16.msra.mxu0 %v881
      %902 = vmatpush.bf16.msra.mxu0 %v880
      %903 = vmatmul.bf16.gmra.mxu0 %v889
      %v904 = vpop.f32.mrf.mxu0
      %v905 = vadd.f32 %v864, %v904
      %v906 = vpop.f32.mrf.mxu0
      %v907 = vadd.f32 %v864, %v906
      %908 = vdwg.mxu0
      %v909 = vmax.f32 %v905, 0.0
      %v910 = vmax.f32 %v907, 0.0
      %v911 = vpack.c.bf16 %v910, %v909
      %v912 = vld [vmem:[%s9] sm:$0xf]
      %v913 = vld [vmem:[%s9 + $0x4] sm:$0x1]
      %v914 = vld [vmem:[%s10] sm:$0x1]
      %v916 = vperm.slane %v914, 0
      %v920 = vunpack.c.l.b16 %v912
      %v921 = vunpack.c.l.b16 %v913
      %v922 = vpack.c.b16 %v921, %v920
      %vm923 = vcmask 80896
      %v925 = vsel %vm923, %v911, 0
      %vm927 = vcmask 1044480
      %v929 = vsel %vm927, %v922, 0
      %931 = vmatpush.bf16.msra.mxu0 0
      %932 = vmatpush.bf16.msra.mxu0 0
      %933 = vmatpush.bf16.msra.mxu0 0
      %934 = vmatpush.bf16.msra.mxu0 0
      %935 = vmatpush.bf16.msra.mxu0 0
      %936 = vmatpush.bf16.msra.mxu0 0
      %937 = vmatpush.bf16.msra.mxu0 0
      %938 = vmatpush.bf16.msra.mxu0 %v929
      %939 = vmatmul.bf16.gmra.mxu0 %v925
      %v940 = vpop.f32.mrf.mxu0
      %v941 = vadd.f32 %v916, %v940
      %v942 = vpop.f32.mrf.mxu0
      %v943 = vadd.f32 %v916, %v942
      %944 = vdwg.mxu0
      %v945 = vmax.f32 %v941, 0.0
      %v946 = vmax.f32 %v943, 0.0
      %vm947 = vcmask 15360
      %948 = vst.msk [vmem:[%s391] sm:$0xff] %vm947, %v945
      %949 = vst.msk [vmem:[%s391 + $0x8] sm:$0xff] %vm947, %v946
      %s950 = smul.u32 2, %s22
      %p951 = scmp.lt.s32.totalorder %s950, 3
      %s952 = scalar_select %p951, %s950, 3
      %s953 = smul.addr %s952, 8
      %s954 = scalar_lea.vmem %s11, %s953
      // Predicated region
      $region65: #{tpu_custom_call.1} parent=63 // pred_check
        %p955 = pneg %p276
      $region66: #{tpu_custom_call.1} parent=63 // pred_check_branch
        %957 = sbr.rel (%p955) target = $region68
      $region67: #{tpu_custom_call.1} parent=63 // pred_region
        %s958 = smul.u32 2, %s22
      $region68: #{tpu_custom_call.1} parent=63 // pred_fallthru
        _
    $region64: #{tpu_custom_call.1} parent=5 // pred_fallthru
      _
    %p959 = scmp.le.s32.totalorder 2, %s17
    // Predicated region
    $region69: #{tpu_custom_call.1} parent=5 // pred_check
      %p960 = pneg %p959
    $region70: #{tpu_custom_call.1} parent=5 // pred_check_branch
      %962 = sbr.rel (%p960) target = $region72
    $region71: #{tpu_custom_call.1} parent=5 // pred_region
      %s963 = ssub.s32 %s17, 2
      // Predicated region
      $region73: #{tpu_custom_call.1} parent=71 // pred_check
        %p964 = pneg %p282
      $region74: #{tpu_custom_call.1} parent=71 // pred_check_branch
        %966 = sbr.rel (%p964) target = $region76
      $region75: #{tpu_custom_call.1} parent=71 // pred_region
        %s967 = smul.u32 2, %s23
        %p968 = scmp.lt.s32.totalorder %s967, 3
        %s969 = scalar_select %p968, %s967, 3
        %s970 = smul.addr %s969, 8
        %s971 = scalar_lea.vmem %s11, %s970
      $region76: #{tpu_custom_call.1} parent=71 // pred_fallthru
        _
    $region72: #{tpu_custom_call.1} parent=5 // pred_fallthru
      _
  $region6: #{tpu_custom_call.1} parent=0 // loop_footer
    %s21 = sadd.s32 1, %s17
  $region7: #{tpu_custom_call.1} parent=0 // loop_footer_branch
    %16 = sbr.rel target = $region3
  $region8: #{tpu_custom_call.1} parent=0 // loop_exit
    _

</llo_original>
